<compile_context>
chip_gen: v7x
topology: tpu7x:2x2x1
jax: 0.10.0
libtpu: 0.0.40
codegen_flags: <defaults>
</compile_context>

<pallas_src>
import functools

import jax
import jax.numpy as jnp
from jax.experimental import pallas as pl
from jax.experimental.pallas import tpu as pltpu


def _pick_seq_tile(seq_len, target=128):
    """Largest multiple of 8 that divides seq_len and is <= target (else seq_len)."""
    if seq_len % 8 != 0:
        return seq_len
    t = (min(target, seq_len) // 8) * 8
    for cand in range(t, 0, -8):
        if seq_len % cand == 0:
            return cand
    return seq_len


# --------------------- kernel A: LayerNorm1 + Q/K/V projections ---------------------
def _ln_qkv_kernel(x_ref, ln1w_ref, ln1b_ref,
                   wq_ref, bq_ref, wk_ref, bk_ref, wv_ref, bv_ref,
                   q_ref, k_ref, v_ref, *, eps):
    x = x_ref[0]                                               # (T, E) f32
    mu = jnp.mean(x, axis=-1, keepdims=True)
    var = jnp.mean((x - mu) ** 2, axis=-1, keepdims=True)
    h = ((x - mu) * jax.lax.rsqrt(var + eps) * ln1w_ref[...] + ln1b_ref[...]
         ).astype(jnp.bfloat16)                                # bf16 MXU operand

    def proj(w_ref, b_ref):
        y = jnp.dot(h, w_ref[...], preferred_element_type=jnp.float32) + b_ref[...]
        return y.astype(jnp.bfloat16)

    q_ref[0] = proj(wq_ref, bq_ref)     # attention scale already folded into wq/bq
    k_ref[0] = proj(wk_ref, bk_ref)
    v_ref[0] = proj(wv_ref, bv_ref)


# ------- kernel B: attention (head axis = grid reduction) + out-proj + MLP ----------
def _make_attn_mlp_kernel(has_mask, eps):
    def kernel(*refs):
        if has_mask:
            (x_ref, q_ref, k_ref, v_ref, mask_ref,
             wo_ref, bo_ref, ln2w_ref, ln2b_ref,
             w1_ref, b1_ref, w2_ref, b2_ref,
             out_ref, acc_ref) = refs
        else:
            (x_ref, q_ref, k_ref, v_ref,
             wo_ref, bo_ref, ln2w_ref, ln2b_ref,
             w1_ref, b1_ref, w2_ref, b2_ref,
             out_ref, acc_ref) = refs
            mask_ref = None

        h_idx = pl.program_id(2)

        @pl.when(h_idx == 0)
        def _():
            acc_ref[...] = jnp.zeros_like(acc_ref)

        q = q_ref[0, 0]                                        # (T, D) bf16
        k = k_ref[0, 0]                                        # (S, D) bf16
        v = v_ref[0, 0]                                        # (S, D) bf16

        # scores: (T, S), lane-dense along S; bf16 operands, f32 accumulation
        s = jax.lax.dot_general(q, k, (((1,), (1,)), ((), ())),
                                preferred_element_type=jnp.float32)
        if has_mask:
            s = s + mask_ref[0, 0]                             # additive (causal+attn) mask
        s = s - jnp.max(s, axis=-1, keepdims=True)
        p = jnp.exp(s)
        # NOTE: a fully masked row (all -inf) gives sum==0 -> NaN, same as torch softmax.
        p = p * pl.reciprocal(jnp.sum(p, axis=-1, keepdims=True), approx=True)

        o = jnp.dot(p.astype(jnp.bfloat16), v,
                    preferred_element_type=jnp.float32)        # (T, D)
        # per-head slice of out_proj, accumulated over the head grid axis
        acc_ref[...] += jnp.dot(o.astype(jnp.bfloat16), wo_ref[0],
                                preferred_element_type=jnp.float32)

        @pl.when(h_idx == pl.num_programs(2) - 1)
        def _():
            xr = x_ref[0] + acc_ref[...] + bo_ref[...]          # residual + out-proj bias
            mu = jnp.mean(xr, axis=-1, keepdims=True)
            var = jnp.mean((xr - mu) ** 2, axis=-1, keepdims=True)
            h2 = ((xr - mu) * jax.lax.rsqrt(var + eps) * ln2w_ref[...]
                  + ln2b_ref[...]).astype(jnp.bfloat16)
            f = jnp.dot(h2, w1_ref[...], preferred_element_type=jnp.float32) + b1_ref[...]
            f = f * jax.nn.sigmoid(f)                           # SiLU
            f = jnp.dot(f.astype(jnp.bfloat16), w2_ref[...],
                        preferred_element_type=jnp.float32) + b2_ref[...]
            out_ref[0] = (xr + f).astype(out_ref.dtype)         # second residual

    return kernel


def transformer_block(x, mask, p, *, num_heads, head_dim, eps=1e-5):
    B, S, E = x.shape
    D = head_dim
    inner = num_heads * head_dim
    inter = p["w1"].shape[1]
    T = _pick_seq_tile(S)

    def const(shape):
        nd = len(shape)
        return pl.BlockSpec(shape, lambda *_a, _nd=nd: (0,) * _nd)

    # ---------------- kernel A: LN1 + QKV projections ----------------
    a_in_specs = [
        pl.BlockSpec((1, T, E), lambda b, i: (b, i, 0)),       # x tile
        const((1, E)), const((1, E)),                          # ln1 w/b
        const((E, inner)), const((1, inner)),                  # wq/bq (scale folded)
        const((E, inner)), const((1, inner)),                  # wk/bk
        const((E, inner)), const((1, inner)),                  # wv/bv
    ]
    qkv_shape = jax.ShapeDtypeStruct((B, S, inner), jnp.bfloat16)
    q, k, v = pl.pallas_call(
        functools.partial(_ln_qkv_kernel, eps=eps),
        out_shape=(qkv_shape, qkv_shape, qkv_shape),
        grid=(B, S // T),
        in_specs=a_in_specs,
        out_specs=(pl.BlockSpec((1, T, inner), lambda b, i: (b, i, 0)),) * 3,
        compiler_params=pltpu.CompilerParams(
            dimension_semantics=("parallel", "parallel")),
    )(x, p["ln1_w"], p["ln1_b"],
      p["wq"], p["bq"], p["wk"], p["bk"], p["wv"], p["bv"])

    # head split in plain XLA (keeps the kernels free of in-kernel relayouts)
    def to_heads(t):
        return t.reshape(B, S, num_heads, head_dim).transpose(0, 2, 1, 3)
    qh, kh, vh = to_heads(q), to_heads(k), to_heads(v)

    # ---------------- kernel B: attention + out-proj + MLP ----------------
    has_mask = mask is not None
    b_in_specs = [
        pl.BlockSpec((1, T, E), lambda b, i, h: (b, i, 0)),        # residual x tile
        pl.BlockSpec((1, 1, T, D), lambda b, i, h: (b, h, i, 0)),  # q tile, head h
        pl.BlockSpec((1, 1, S, D), lambda b, i, h: (b, h, 0, 0)),  # k full, head h
        pl.BlockSpec((1, 1, S, D), lambda b, i, h: (b, h, 0, 0)),  # v full, head h
    ]
    b_args = [x, qh, kh, vh]
    if has_mask:
        b_in_specs.append(pl.BlockSpec((1, 1, T, S), lambda b, i, h: (b, 0, i, 0)))
        b_args.append(mask)
    b_in_specs += [
        pl.BlockSpec((1, D, E), lambda b, i, h: (h, 0, 0)),        # per-head wo slice
        const((1, E)),                                             # bo
        const((1, E)), const((1, E)),                              # ln2 w/b
        const((E, inter)), const((1, inter)),                      # fc1
        const((inter, E)), const((1, E)),                          # fc2
    ]
    b_args += [p["wo_h"], p["bo"], p["ln2_w"], p["ln2_b"],
               p["w1"], p["b1"], p["w2"], p["b2"]]

    return pl.pallas_call(
        _make_attn_mlp_kernel(has_mask, eps),
        out_shape=jax.ShapeDtypeStruct((B, S, E), x.dtype),
        grid=(B, S // T, num_heads),
        in_specs=b_in_specs,
        out_specs=pl.BlockSpec((1, T, E), lambda b, i, h: (b, i, 0)),
        scratch_shapes=[pltpu.VMEM((T, E), jnp.float32)],
        compiler_params=pltpu.CompilerParams(
            dimension_semantics=("parallel", "parallel", "arbitrary")),
    )(*b_args)


def transformer_forward(x, layer_params, *, num_heads, head_dim, eps=1e-5,
                        attention_mask=None, causal_attention_mask=None):
    # Only build/pass a mask when one is actually provided (compile-time skip otherwise).
    mask = None
    if causal_attention_mask is not None:
        mask = causal_attention_mask
    if attention_mask is not None:
        mask = attention_mask if mask is None else mask + attention_mask
    if mask is not None:
        mask = mask.astype(x.dtype)
    for p in layer_params:
        x = transformer_block(x, mask, p, num_heads=num_heads, head_dim=head_dim, eps=eps)
    return x
    # TODO(synk): output_attentions=True would also return per-layer attention maps;
    # Transformer.forward only returns hidden_states, so they are not emitted.


# ------------------------------ parameter handling -----------------------------------
def init_params(key, depth, hidden, num_heads, head_dim, mult=4):
    inner = num_heads * head_dim
    inter = hidden * mult
    layers = []
    for d in range(depth):
        k = jax.random.split(jax.random.fold_in(key, d), 6)
        layers.append(dict(
            ln1_w=jnp.ones((1, hidden), jnp.float32),
            ln1_b=jnp.zeros((1, hidden), jnp.float32),
            wq=0.02 * jax.random.normal(k[0], (hidden, inner), jnp.float32),
            bq=jnp.zeros((1, inner), jnp.float32),
            wk=0.02 * jax.random.normal(k[1], (hidden, inner), jnp.float32),
            bk=jnp.zeros((1, inner), jnp.float32),
            wv=0.02 * jax.random.normal(k[2], (hidden, inner), jnp.float32),
            bv=jnp.zeros((1, inner), jnp.float32),
            wo=0.02 * jax.random.normal(k[3], (inner, hidden), jnp.float32),
            bo=jnp.zeros((1, hidden), jnp.float32),
            ln2_w=jnp.ones((1, hidden), jnp.float32),
            ln2_b=jnp.zeros((1, hidden), jnp.float32),
            w1=0.02 * jax.random.normal(k[4], (hidden, inter), jnp.float32),
            b1=jnp.zeros((1, inter), jnp.float32),
            w2=0.02 * jax.random.normal(k[5], (inter, hidden), jnp.float32),
            b2=jnp.zeros((1, hidden), jnp.float32),
        ))
    return layers


def prepare_params(layers, *, num_heads, head_dim):
    """One-time host-side prep: fold the attention scale into wq/bq, cast matmul
    weights to bf16 (MXU operands), and reshape wo into per-head (H, D, E) slices."""
    scale = float(head_dim) ** (-0.5)
    out = []
    for p in layers:
        E = p["wq"].shape[0]
        q = dict(p)
        q["wq"] = (p["wq"] * scale).astype(jnp.bfloat16)
        q["bq"] = p["bq"] * scale
        q["wk"] = p["wk"].astype(jnp.bfloat16)
        q["wv"] = p["wv"].astype(jnp.bfloat16)
        q["wo_h"] = p["wo"].reshape(num_heads, head_dim, E).astype(jnp.bfloat16)
        del q["wo"]
        q["w1"] = p["w1"].astype(jnp.bfloat16)
        q["w2"] = p["w2"].astype(jnp.bfloat16)
        out.append(q)
    return out


# ---------------------- pure-JAX reference (for checking) ----------------------------
def reference_forward(x, prepared_layers, *, num_heads, head_dim, eps=1e-5, mask=None):
    B, S, E = x.shape
    for p in prepared_layers:
        wq = p["wq"].astype(jnp.float32)
        wk = p["wk"].astype(jnp.float32)
        wv = p["wv"].astype(jnp.float32)
        wo = p["wo_h"].astype(jnp.float32).reshape(num_heads * head_dim, E)
        w1 = p["w1"].astype(jnp.float32)
        w2 = p["w2"].astype(jnp.float32)

        res = x
        mu = jnp.mean(x, -1, keepdims=True)
        var = jnp.mean((x - mu) ** 2, -1, keepdims=True)
        h = (x - mu) / jnp.sqrt(var + eps) * p["ln1_w"] + p["ln1_b"]
        q = h @ wq + p["bq"]            # scale already folded into wq/bq
        k = h @ wk + p["bk"]
        v = h @ wv + p["bv"]

        def split(t):
            return t.reshape(B, S, num_heads, head_dim).transpose(0, 2, 1, 3)
        qh, kh, vh = split(q), split(k), split(v)
        s = jnp.einsum("bhqd,bhkd->bhqk", qh, kh)
        if mask is not None:
            s = s + mask
        w = jax.nn.softmax(s, axis=-1)
        o = jnp.einsum("bhqk,bhkd->bhqd", w, vh).transpose(0, 2, 1, 3).reshape(B, S, -1)
        x = res + (o @ wo + p["bo"])

        res = x
        mu = jnp.mean(x, -1, keepdims=True)
        var = jnp.mean((x - mu) ** 2, -1, keepdims=True)
        h2 = (x - mu) / jnp.sqrt(var + eps) * p["ln2_w"] + p["ln2_b"]
        f = h2 @ w1 + p["b1"]
        f = f * jax.nn.sigmoid(f)
        x = res + (f @ w2 + p["b2"])
    return x


if __name__ == "__main__":
    # Small config consistent with the module structure (defaults are hidden=512,
    # heads=12, head_dim=64 -> inner=768; here scaled down but inner != hidden kept).
    DEPTH, HIDDEN, HEADS, HEAD_DIM = 2, 128, 4, 64
    B, S = 2, 16

    key = jax.random.PRNGKey(0)
    x = jax.random.normal(jax.random.fold_in(key, 1000), (B, S, HIDDEN), jnp.float32)
    raw_params = init_params(key, DEPTH, HIDDEN, HEADS, HEAD_DIM)
    params = prepare_params(raw_params, num_heads=HEADS, head_dim=HEAD_DIM)

    # --- unmasked path ---
    out = transformer_forward(x, params, num_heads=HEADS, head_dim=HEAD_DIM)
    out = jax.block_until_ready(out)
    ref = reference_forward(x, params, num_heads=HEADS, head_dim=HEAD_DIM)
    assert out.shape == (B, S, HIDDEN)
    assert jnp.allclose(out, ref, atol=1e-2, rtol=1e-2), "mismatch vs JAX reference (no mask)"

    # --- causal-masked path (validates the additive-mask handling) ---
    causal = jnp.triu(jnp.full((S, S), -1e9, jnp.float32), k=1)[None, None]
    causal = jnp.broadcast_to(causal, (B, 1, S, S))
    out_m = transformer_forward(x, params, num_heads=HEADS, head_dim=HEAD_DIM,
                                causal_attention_mask=causal)
    out_m = jax.block_until_ready(out_m)
    ref_m = reference_forward(x, params, num_heads=HEADS, head_dim=HEAD_DIM, mask=causal)
    assert jnp.allclose(out_m, ref_m, atol=1e-2, rtol=1e-2), "mismatch vs JAX reference (causal mask)"

    print("KERNEL_OK")
</pallas_src>

<mosaic_0001>
module attributes {stable_mosaic.version = 11 : i64} {
  func.func @_ln_qkv_kernel(%arg0: i32, %arg1: i32, %arg2: memref<1x16x128xf32, #tpu.memory_space<vmem>>, %arg3: memref<1x128xf32, #tpu.memory_space<vmem>>, %arg4: memref<1x128xf32, #tpu.memory_space<vmem>>, %arg5: memref<128x256xbf16, #tpu.memory_space<vmem>>, %arg6: memref<1x256xf32, #tpu.memory_space<vmem>>, %arg7: memref<128x256xbf16, #tpu.memory_space<vmem>>, %arg8: memref<1x256xf32, #tpu.memory_space<vmem>>, %arg9: memref<128x256xbf16, #tpu.memory_space<vmem>>, %arg10: memref<1x256xf32, #tpu.memory_space<vmem>>, %arg11: memref<1x16x256xbf16, #tpu.memory_space<vmem>>, %arg12: memref<1x16x256xbf16, #tpu.memory_space<vmem>>, %arg13: memref<1x16x256xbf16, #tpu.memory_space<vmem>>) attributes {dimension_semantics = [#tpu.dimension_semantics<parallel>, #tpu.dimension_semantics<parallel>], iteration_bounds = array<i64: 2, 1>, scalar_prefetch = 0 : i64, scratch_operands = 0 : i64, tpu.core_type = #tpu.core_type<tc>, window_params = [{transform_indices = @transform_0, window_bounds = array<i64: 1, 16, 128>}, {pipeline_mode = #tpu.pipeline_mode<synchronous>, transform_indices = @transform_1, window_bounds = array<i64: 1, 128>}, {pipeline_mode = #tpu.pipeline_mode<synchronous>, transform_indices = @transform_2, window_bounds = array<i64: 1, 128>}, {pipeline_mode = #tpu.pipeline_mode<synchronous>, transform_indices = @transform_3, window_bounds = array<i64: 128, 256>}, {pipeline_mode = #tpu.pipeline_mode<synchronous>, transform_indices = @transform_4, window_bounds = array<i64: 1, 256>}, {pipeline_mode = #tpu.pipeline_mode<synchronous>, transform_indices = @transform_5, window_bounds = array<i64: 128, 256>}, {pipeline_mode = #tpu.pipeline_mode<synchronous>, transform_indices = @transform_6, window_bounds = array<i64: 1, 256>}, {pipeline_mode = #tpu.pipeline_mode<synchronous>, transform_indices = @transform_7, window_bounds = array<i64: 128, 256>}, {pipeline_mode = #tpu.pipeline_mode<synchronous>, transform_indices = @transform_8, window_bounds = array<i64: 1, 256>}, {transform_indices = @transform_9, window_bounds = array<i64: 1, 16, 256>}, {transform_indices = @transform_10, window_bounds = array<i64: 1, 16, 256>}, {transform_indices = @transform_11, window_bounds = array<i64: 1, 16, 256>}]} {
    %c0 = arith.constant 0 : index
    %c0_0 = arith.constant 0 : index
    %c0_1 = arith.constant 0 : index
    %0 = vector.load %arg2[%c0, %c0_0, %c0_1] : memref<1x16x128xf32, #tpu.memory_space<vmem>>, vector<1x16x128xf32>
    %1 = vector.shape_cast %0 : vector<1x16x128xf32> to vector<16x128xf32>
    %cst = arith.constant dense<0.000000e+00> : vector<16xf32>
    %2 = vector.multi_reduction <add>, %1, %cst [1] : vector<16x128xf32> to vector<16xf32>
    %3 = vector.shape_cast %2 : vector<16xf32> to vector<16x1xf32>
    %cst_2 = arith.constant 1.280000e+02 : f32
    %4 = vector.broadcast %cst_2 : f32 to vector<16x1xf32>
    %5 = arith.divf %3, %4 : vector<16x1xf32>
    %6 = vector.broadcast %5 : vector<16x1xf32> to vector<16x128xf32>
    %7 = arith.subf %1, %6 : vector<16x128xf32>
    %8 = arith.mulf %7, %7 : vector<16x128xf32>
    %cst_3 = arith.constant dense<0.000000e+00> : vector<16xf32>
    %9 = vector.multi_reduction <add>, %8, %cst_3 [1] : vector<16x128xf32> to vector<16xf32>
    %10 = vector.shape_cast %9 : vector<16xf32> to vector<16x1xf32>
    %cst_4 = arith.constant 1.280000e+02 : f32
    %11 = vector.broadcast %cst_4 : f32 to vector<16x1xf32>
    %12 = arith.divf %10, %11 : vector<16x1xf32>
    %13 = vector.broadcast %5 : vector<16x1xf32> to vector<16x128xf32>
    %14 = arith.subf %1, %13 : vector<16x128xf32>
    %cst_5 = arith.constant 9.99999974E-6 : f32
    %15 = vector.broadcast %cst_5 : f32 to vector<16x1xf32>
    %16 = arith.addf %12, %15 : vector<16x1xf32>
    %17 = math.rsqrt %16 : vector<16x1xf32>
    %18 = vector.broadcast %17 : vector<16x1xf32> to vector<16x128xf32>
    %19 = arith.mulf %14, %18 : vector<16x128xf32>
    %c0_6 = arith.constant 0 : index
    %c0_7 = arith.constant 0 : index
    %20 = vector.load %arg3[%c0_6, %c0_7] : memref<1x128xf32, #tpu.memory_space<vmem>>, vector<1x128xf32>
    %21 = vector.broadcast %20 : vector<1x128xf32> to vector<16x128xf32>
    %22 = arith.mulf %19, %21 : vector<16x128xf32>
    %c0_8 = arith.constant 0 : index
    %c0_9 = arith.constant 0 : index
    %23 = vector.load %arg4[%c0_8, %c0_9] : memref<1x128xf32, #tpu.memory_space<vmem>>, vector<1x128xf32>
    %24 = vector.broadcast %23 : vector<1x128xf32> to vector<16x128xf32>
    %25 = arith.addf %22, %24 : vector<16x128xf32>
    %26 = arith.truncf %25 : vector<16x128xf32> to vector<16x128xbf16>
    %c0_10 = arith.constant 0 : index
    %c0_11 = arith.constant 0 : index
    %27 = vector.load %arg5[%c0_10, %c0_11] : memref<128x256xbf16, #tpu.memory_space<vmem>>, vector<128x256xbf16>
    %cst_12 = arith.constant dense<0.000000e+00> : vector<16x256xf32>
    %28 = tpu.matmul %26, %27, %cst_12 {dimension_numbers = #tpu.dot_dimension_numbers<[1], [0], [0], [1], [0, 0, 1, 1], [], []>} : vector<16x128xbf16>, vector<128x256xbf16>, vector<16x256xf32> -> vector<16x256xf32>
    %c0_13 = arith.constant 0 : index
    %c0_14 = arith.constant 0 : index
    %29 = vector.load %arg6[%c0_13, %c0_14] : memref<1x256xf32, #tpu.memory_space<vmem>>, vector<1x256xf32>
    %30 = vector.broadcast %29 : vector<1x256xf32> to vector<16x256xf32>
    %31 = arith.addf %28, %30 : vector<16x256xf32>
    %32 = arith.truncf %31 : vector<16x256xf32> to vector<16x256xbf16>
    %c0_15 = arith.constant 0 : index
    %c0_16 = arith.constant 0 : index
    %c0_17 = arith.constant 0 : index
    %33 = vector.load %arg11[%c0_15, %c0_16, %c0_17] : memref<1x16x256xbf16, #tpu.memory_space<vmem>>, vector<1x16x256xbf16>
    %34 = vector.shape_cast %33 : vector<1x16x256xbf16> to vector<16x256xbf16>
    %35 = vector.shape_cast %32 : vector<16x256xbf16> to vector<1x16x256xbf16>
    tpu.vector_store %arg11[%c0_15, %c0_16, %c0_17], %35 {strides = array<i32>} : memref<1x16x256xbf16, #tpu.memory_space<vmem>>, vector<1x16x256xbf16>,
    %c0_18 = arith.constant 0 : index
    %c0_19 = arith.constant 0 : index
    %36 = vector.load %arg7[%c0_18, %c0_19] : memref<128x256xbf16, #tpu.memory_space<vmem>>, vector<128x256xbf16>
    %cst_20 = arith.constant dense<0.000000e+00> : vector<16x256xf32>
    %37 = tpu.matmul %26, %36, %cst_20 {dimension_numbers = #tpu.dot_dimension_numbers<[1], [0], [0], [1], [0, 0, 1, 1], [], []>} : vector<16x128xbf16>, vector<128x256xbf16>, vector<16x256xf32> -> vector<16x256xf32>
    %c0_21 = arith.constant 0 : index
    %c0_22 = arith.constant 0 : index
    %38 = vector.load %arg8[%c0_21, %c0_22] : memref<1x256xf32, #tpu.memory_space<vmem>>, vector<1x256xf32>
    %39 = vector.broadcast %38 : vector<1x256xf32> to vector<16x256xf32>
    %40 = arith.addf %37, %39 : vector<16x256xf32>
    %41 = arith.truncf %40 : vector<16x256xf32> to vector<16x256xbf16>
    %c0_23 = arith.constant 0 : index
    %c0_24 = arith.constant 0 : index
    %c0_25 = arith.constant 0 : index
    %42 = vector.load %arg12[%c0_23, %c0_24, %c0_25] : memref<1x16x256xbf16, #tpu.memory_space<vmem>>, vector<1x16x256xbf16>
    %43 = vector.shape_cast %42 : vector<1x16x256xbf16> to vector<16x256xbf16>
    %44 = vector.shape_cast %41 : vector<16x256xbf16> to vector<1x16x256xbf16>
    tpu.vector_store %arg12[%c0_23, %c0_24, %c0_25], %44 {strides = array<i32>} : memref<1x16x256xbf16, #tpu.memory_space<vmem>>, vector<1x16x256xbf16>,
    %c0_26 = arith.constant 0 : index
    %c0_27 = arith.constant 0 : index
    %45 = vector.load %arg9[%c0_26, %c0_27] : memref<128x256xbf16, #tpu.memory_space<vmem>>, vector<128x256xbf16>
    %cst_28 = arith.constant dense<0.000000e+00> : vector<16x256xf32>
    %46 = tpu.matmul %26, %45, %cst_28 {dimension_numbers = #tpu.dot_dimension_numbers<[1], [0], [0], [1], [0, 0, 1, 1], [], []>} : vector<16x128xbf16>, vector<128x256xbf16>, vector<16x256xf32> -> vector<16x256xf32>
    %c0_29 = arith.constant 0 : index
    %c0_30 = arith.constant 0 : index
    %47 = vector.load %arg10[%c0_29, %c0_30] : memref<1x256xf32, #tpu.memory_space<vmem>>, vector<1x256xf32>
    %48 = vector.broadcast %47 : vector<1x256xf32> to vector<16x256xf32>
    %49 = arith.addf %46, %48 : vector<16x256xf32>
    %50 = arith.truncf %49 : vector<16x256xf32> to vector<16x256xbf16>
    %c0_31 = arith.constant 0 : index
    %c0_32 = arith.constant 0 : index
    %c0_33 = arith.constant 0 : index
    %51 = vector.load %arg13[%c0_31, %c0_32, %c0_33] : memref<1x16x256xbf16, #tpu.memory_space<vmem>>, vector<1x16x256xbf16>
    %52 = vector.shape_cast %51 : vector<1x16x256xbf16> to vector<16x256xbf16>
    %53 = vector.shape_cast %50 : vector<16x256xbf16> to vector<1x16x256xbf16>
    tpu.vector_store %arg13[%c0_31, %c0_32, %c0_33], %53 {strides = array<i32>} : memref<1x16x256xbf16, #tpu.memory_space<vmem>>, vector<1x16x256xbf16>,
    return
  }
  func.func @transform_0(%arg0: i32, %arg1: i32) -> (i32, i32, i32) {
    %c0_i32 = arith.constant 0 : i32
    %c0_i32_0 = arith.constant 0 : i32
    return %arg0, %arg1, %c0_i32 : i32, i32, i32
  }
  func.func @transform_1(%arg0: i32, %arg1: i32) -> (i32, i32) {
    %c0_i32 = arith.constant 0 : i32
    %c0_i32_0 = arith.constant 0 : i32
    %c0_i32_1 = arith.constant 0 : i32
    return %c0_i32, %c0_i32_0 : i32, i32
  }
  func.func @transform_2(%arg0: i32, %arg1: i32) -> (i32, i32) {
    %c0_i32 = arith.constant 0 : i32
    %c0_i32_0 = arith.constant 0 : i32
    %c0_i32_1 = arith.constant 0 : i32
    return %c0_i32, %c0_i32_0 : i32, i32
  }
  func.func @transform_3(%arg0: i32, %arg1: i32) -> (i32, i32) {
    %c0_i32 = arith.constant 0 : i32
    %c0_i32_0 = arith.constant 0 : i32
    %c0_i32_1 = arith.constant 0 : i32
    return %c0_i32, %c0_i32_0 : i32, i32
  }
  func.func @transform_4(%arg0: i32, %arg1: i32) -> (i32, i32) {
    %c0_i32 = arith.constant 0 : i32
    %c0_i32_0 = arith.constant 0 : i32
    %c0_i32_1 = arith.constant 0 : i32
    return %c0_i32, %c0_i32_0 : i32, i32
  }
  func.func @transform_5(%arg0: i32, %arg1: i32) -> (i32, i32) {
    %c0_i32 = arith.constant 0 : i32
    %c0_i32_0 = arith.constant 0 : i32
    %c0_i32_1 = arith.constant 0 : i32
    return %c0_i32, %c0_i32_0 : i32, i32
  }
  func.func @transform_6(%arg0: i32, %arg1: i32) -> (i32, i32) {
    %c0_i32 = arith.constant 0 : i32
    %c0_i32_0 = arith.constant 0 : i32
    %c0_i32_1 = arith.constant 0 : i32
    return %c0_i32, %c0_i32_0 : i32, i32
  }
  func.func @transform_7(%arg0: i32, %arg1: i32) -> (i32, i32) {
    %c0_i32 = arith.constant 0 : i32
    %c0_i32_0 = arith.constant 0 : i32
    %c0_i32_1 = arith.constant 0 : i32
    return %c0_i32, %c0_i32_0 : i32, i32
  }
  func.func @transform_8(%arg0: i32, %arg1: i32) -> (i32, i32) {
    %c0_i32 = arith.constant 0 : i32
    %c0_i32_0 = arith.constant 0 : i32
    %c0_i32_1 = arith.constant 0 : i32
    return %c0_i32, %c0_i32_0 : i32, i32
  }
  func.func @transform_9(%arg0: i32, %arg1: i32) -> (i32, i32, i32) {
    %c0_i32 = arith.constant 0 : i32
    %c0_i32_0 = arith.constant 0 : i32
    return %arg0, %arg1, %c0_i32 : i32, i32, i32
  }
  func.func @transform_10(%arg0: i32, %arg1: i32) -> (i32, i32, i32) {
    %c0_i32 = arith.constant 0 : i32
    %c0_i32_0 = arith.constant 0 : i32
    return %arg0, %arg1, %c0_i32 : i32, i32, i32
  }
  func.func @transform_11(%arg0: i32, %arg1: i32) -> (i32, i32, i32) {
    %c0_i32 = arith.constant 0 : i32
    %c0_i32_0 = arith.constant 0 : i32
    return %arg0, %arg1, %c0_i32 : i32, i32, i32
  }
}

</mosaic_0001>

<llo_original>
// kernel: tpu_custom_call.1
$region0: #{tpu_custom_call.1}
  #allocation0 [shape = 'u32[]', space=smem, size = 0x4, offset = 0x4, fixed_abs, tag = 'smem constant byte address 0x4 - core index']
  #allocation1 [shape = 'u32[144,128]{1,0:T(1,128)}', space=vmem, size = 0x12000, scoped, tag = 'internal scratch']
  %s0 = inlined_call_operand.hbm [shape: f32[2,16,128], index: 0, kind: input, shape index: {}]
  %s1 = inlined_call_operand.vmem [shape: f32[1,128], index: 1, kind: input, shape index: {}]
  %s2 = inlined_call_operand.hbm [shape: f32[1,128], index: 2, kind: input, shape index: {}]
  %s3 = inlined_call_operand.hbm [shape: bf16[128,256], index: 3, kind: input, shape index: {}]
  %s4 = inlined_call_operand.vmem [shape: f32[1,256], index: 4, kind: input, shape index: {}]
  %s5 = inlined_call_operand.hbm [shape: bf16[128,256], index: 5, kind: input, shape index: {}]
  %s6 = inlined_call_operand.vmem [shape: f32[1,256], index: 6, kind: input, shape index: {}]
  %s7 = inlined_call_operand.hbm [shape: bf16[128,256], index: 7, kind: input, shape index: {}]
  %s8 = inlined_call_operand.vmem [shape: f32[1,256], index: 8, kind: input, shape index: {}]
  %s9 = inlined_call_operand.hbm [shape: bf16[2,16,256], index: 9, kind: output, shape index: {0}]
  %s10 = inlined_call_operand.hbm [shape: bf16[2,16,256], index: 10, kind: output, shape index: {1}]
  %s11 = inlined_call_operand.hbm [shape: bf16[2,16,256], index: 11, kind: output, shape index: {2}]
  %12 = xla_tuple %s9, %s10, %s11
  %s13 = sld [smem:[#allocation0]]
  $region105: #{tpu_custom_call.1} parent=0
    _
  %s15 = ssub.s32 1, %s13
  %s16 = scalar_select 0, %s15, %s13
  $region1: #{tpu_custom_call.1} parent=0
    #allocation2 [shape = 'u8[16384]{0}', space=vmem, size = 0x4000, scoped, tag = 'input window, operand 0']
    #allocation3 [shape = 's32[2]{0}', space=sflag, size = 0x8, scoped, tag = 'scoped memory for tpu_custom_call.1']
    #allocation4 [shape = 's32[2]{0}', space=sflag, size = 0x8, scoped, tag = 'scoped memory for tpu_custom_call.1']
    #allocation5 [shape = 'u8[512]{0}', space=vmem, size = 0x400, scoped, tag = 'input window, operand 2, single buffered']
    #allocation6 [shape = 's32[1]{0}', space=sflag, size = 0x4, scoped, tag = 'scoped memory for tpu_custom_call.1']
    #allocation7 [shape = 'u8[65536]{0}', space=vmem, size = 0x10000, scoped, tag = 'input window, operand 3, single buffered']
    #allocation8 [shape = 'u8[65536]{0}', space=vmem, size = 0x10000, scoped, tag = 'input window, operand 5, single buffered']
    #allocation9 [shape = 's32[1]{0}', space=sflag, size = 0x4, scoped, tag = 'scoped memory for tpu_custom_call.1']
    #allocation10 [shape = 'u8[65536]{0}', space=vmem, size = 0x10000, scoped, tag = 'input window, operand 7, single buffered']
    #allocation11 [shape = 'u8[16384]{0}', space=vmem, size = 0x4000, scoped, tag = 'output window, operand 0']
    #allocation12 [shape = 'u8[16384]{0}', space=vmem, size = 0x4000, scoped, tag = 'output window, operand 1']
    #allocation13 [shape = 's32[2]{0}', space=sflag, size = 0x8, scoped, tag = 'scoped memory for tpu_custom_call.1']
    #allocation14 [shape = 'u8[16384]{0}', space=vmem, size = 0x4000, scoped, tag = 'output window, operand 2']
    %17 = vsyncpa [#allocation3], 0
    %s18 = scalar_lea.sflag [#allocation3], 1
    %19 = vsyncpa %s18, 0
    %20 = vsyncpa [#allocation6], 0
    %21 = vsyncpa [#allocation9], 0
    %22 = vsyncpa [#allocation4], 0
    %s23 = scalar_lea.sflag [#allocation4], 1
    %24 = vsyncpa %s23, 0
    %25 = vsyncpa [#allocation13], 0
    %s26 = scalar_lea.sflag [#allocation13], 1
    %27 = vsyncpa %s26, 0
    loop: start=0, step=1, limit=4
    $region2: #{tpu_custom_call.1} parent=1 // loop_pre_header
      _
    $region3: #{tpu_custom_call.1} parent=1 // loop_header
      %s29 = sphi 0, %s33
      %p30 = scmp.ge.s32.totalorder %s29, 4
      %s36 = sphi 0, %s48
      %s37 = sphi 0, %s44
      %s38 = sphi 0, %s36
      %s39 = sphi 0, %s37
      %s40 = sphi 0, %s38
      %s41 = sphi 0, %s39
      %s53 = sphi 0, %s55
      %s56 = sphi 0, %s53
      %s57 = sphi 0, %s56
      %s73 = sphi 0, %s57
      %s77 = sphi 0, %s77
      %s79 = sphi 0, %s77
      %s80 = sphi 0, %s79
      %s94 = sphi 0, %s80
      %s98 = sphi 0, %s98
      %s100 = sphi 0, %s98
      %s101 = sphi 0, %s100
      %s115 = sphi 0, %s101
      %s119 = sphi 0, %s119
      %s121 = sphi 0, %s119
      %s122 = sphi 0, %s121
      %s136 = sphi 0, %s122
      %s140 = sphi 0, %s140
      %s142 = sphi 0, %s140
      %s143 = sphi 0, %s142
      %s157 = sphi 0, %s143
      %s161 = sphi 0, %s161
      %s163 = sphi 0, %s161
      %s164 = sphi 0, %s163
      %s178 = sphi 0, %s164
      %s182 = sphi 0, %s182
      %s184 = sphi 0, %s182
      %s185 = sphi 0, %s184
      %s199 = sphi 0, %s185
      %s203 = sphi 0, %s203
      %s205 = sphi 0, %s203
      %s206 = sphi 0, %s205
      %s220 = sphi 0, %s206
      %s224 = sphi 0, %s224
      %s226 = sphi 0, %s224
      %s227 = sphi 0, %s226
      %s241 = sphi 0, %s227
      %s249 = sphi 0, %s251
      %s252 = sphi 0, %s249
      %s253 = sphi 0, %s252
      %s269 = sphi 0, %s253
      %s277 = sphi 0, %s279
      %s280 = sphi 0, %s277
      %s281 = sphi 0, %s280
      %s297 = sphi 0, %s281
      %s305 = sphi 0, %s307
      %s308 = sphi 0, %s305
      %s309 = sphi 0, %s308
      %s325 = sphi 0, %s309
    $region4: #{tpu_custom_call.1} parent=1 // loop_header_branch
      %32 = sbr.rel (%p30) target = $region8
    $region5: #{tpu_custom_call.1} parent=1 // loop_body
      %s34 = ssub.s32 %s29, 1
      %s35 = ssub.s32 %s29, 2
      %s42 = sadd.s32 1, %s37
      %p43 = scmp.ge.s32.totalorder %s42, 1
      %s44 = scalar_select %p43, 0, %s42
      %s45 = sadd.s32 1, %s36
      %s46 = scalar_select %p43, %s45, %s36
      %p47 = scmp.ge.s32.totalorder %s46, 2
      %s48 = scalar_select %p47, 0, %s46
      %s49 = ssub.s32 %s36, %s48
      %s50 = ssub.s32 %s37, %s44
      %s51 = sor.u32 %s49, %s50
      %p52 = scmp.eq.s32.totalorder %s51, 0
      %s54 = sadd.s32 %s53, 1
      %s55 = scalar_select %p52, %s53, %s54
      %p58 = pneg %p52
      %p59 = scmp.eq.s32.totalorder %s29, 1
      %p60 = por %p58, %p59
      %p61 = scmp.ne.s32.totalorder %s53, %s56
      %p62 = scmp.eq.s32.totalorder %s29, 0
      %p63 = por %p61, %p62
      %p64 = scmp.ne.s32.totalorder %s53, %s56
      %p65 = scmp.eq.s32.totalorder %s34, 1
      %p66 = por %p64, %p65
      %p67 = scmp.ne.s32.totalorder %s56, %s57
      %p68 = scmp.eq.s32.totalorder %s34, 0
      %p69 = por %p67, %p68
      %p70 = scmp.ne.s32.totalorder %s56, %s57
      %p71 = scmp.eq.s32.totalorder %s35, 1
      %p72 = por %p70, %p71
      %p74 = scmp.ne.s32.totalorder %s57, %s73
      %p75 = scmp.eq.s32.totalorder %s35, 0
      %p76 = por %p74, %p75
      %s78 = sadd.s32 %s77, 1
      %p81 = scmp.eq.s32.totalorder %s29, 1
      %p82 = scmp.ne.s32.totalorder %s77, %s79
      %p83 = scmp.eq.s32.totalorder %s29, 0
      %p84 = por %p82, %p83
      %p85 = scmp.ne.s32.totalorder %s77, %s79
      %p86 = scmp.eq.s32.totalorder %s34, 1
      %p87 = por %p85, %p86
      %p88 = scmp.ne.s32.totalorder %s79, %s80
      %p89 = scmp.eq.s32.totalorder %s34, 0
      %p90 = por %p88, %p89
      %p91 = scmp.ne.s32.totalorder %s79, %s80
      %p92 = scmp.eq.s32.totalorder %s35, 1
      %p93 = por %p91, %p92
      %p95 = scmp.ne.s32.totalorder %s80, %s94
      %p96 = scmp.eq.s32.totalorder %s35, 0
      %p97 = por %p95, %p96
      %s99 = sadd.s32 %s98, 1
      %p102 = scmp.eq.s32.totalorder %s29, 1
      %p103 = scmp.ne.s32.totalorder %s98, %s100
      %p104 = scmp.eq.s32.totalorder %s29, 0
      %p105 = por %p103, %p104
      %p106 = scmp.ne.s32.totalorder %s98, %s100
      %p107 = scmp.eq.s32.totalorder %s34, 1
      %p108 = por %p106, %p107
      %p109 = scmp.ne.s32.totalorder %s100, %s101
      %p110 = scmp.eq.s32.totalorder %s34, 0
      %p111 = por %p109, %p110
      %p112 = scmp.ne.s32.totalorder %s100, %s101
      %p113 = scmp.eq.s32.totalorder %s35, 1
      %p114 = por %p112, %p113
      %p116 = scmp.ne.s32.totalorder %s101, %s115
      %p117 = scmp.eq.s32.totalorder %s35, 0
      %p118 = por %p116, %p117
      %s120 = sadd.s32 %s119, 1
      %p123 = scmp.eq.s32.totalorder %s29, 1
      %p124 = scmp.ne.s32.totalorder %s119, %s121
      %p125 = scmp.eq.s32.totalorder %s29, 0
      %p126 = por %p124, %p125
      %p127 = scmp.ne.s32.totalorder %s119, %s121
      %p128 = scmp.eq.s32.totalorder %s34, 1
      %p129 = por %p127, %p128
      %p130 = scmp.ne.s32.totalorder %s121, %s122
      %p131 = scmp.eq.s32.totalorder %s34, 0
      %p132 = por %p130, %p131
      %p133 = scmp.ne.s32.totalorder %s121, %s122
      %p134 = scmp.eq.s32.totalorder %s35, 1
      %p135 = por %p133, %p134
      %p137 = scmp.ne.s32.totalorder %s122, %s136
      %p138 = scmp.eq.s32.totalorder %s35, 0
      %p139 = por %p137, %p138
      %s141 = sadd.s32 %s140, 1
      %p144 = scmp.eq.s32.totalorder %s29, 1
      %p145 = scmp.ne.s32.totalorder %s140, %s142
      %p146 = scmp.eq.s32.totalorder %s29, 0
      %p147 = por %p145, %p146
      %p148 = scmp.ne.s32.totalorder %s140, %s142
      %p149 = scmp.eq.s32.totalorder %s34, 1
      %p150 = por %p148, %p149
      %p151 = scmp.ne.s32.totalorder %s142, %s143
      %p152 = scmp.eq.s32.totalorder %s34, 0
      %p153 = por %p151, %p152
      %p154 = scmp.ne.s32.totalorder %s142, %s143
      %p155 = scmp.eq.s32.totalorder %s35, 1
      %p156 = por %p154, %p155
      %p158 = scmp.ne.s32.totalorder %s143, %s157
      %p159 = scmp.eq.s32.totalorder %s35, 0
      %p160 = por %p158, %p159
      %s162 = sadd.s32 %s161, 1
      %p165 = scmp.eq.s32.totalorder %s29, 1
      %p166 = scmp.ne.s32.totalorder %s161, %s163
      %p167 = scmp.eq.s32.totalorder %s29, 0
      %p168 = por %p166, %p167
      %p169 = scmp.ne.s32.totalorder %s161, %s163
      %p170 = scmp.eq.s32.totalorder %s34, 1
      %p171 = por %p169, %p170
      %p172 = scmp.ne.s32.totalorder %s163, %s164
      %p173 = scmp.eq.s32.totalorder %s34, 0
      %p174 = por %p172, %p173
      %p175 = scmp.ne.s32.totalorder %s163, %s164
      %p176 = scmp.eq.s32.totalorder %s35, 1
      %p177 = por %p175, %p176
      %p179 = scmp.ne.s32.totalorder %s164, %s178
      %p180 = scmp.eq.s32.totalorder %s35, 0
      %p181 = por %p179, %p180
      %s183 = sadd.s32 %s182, 1
      %p186 = scmp.eq.s32.totalorder %s29, 1
      %p187 = scmp.ne.s32.totalorder %s182, %s184
      %p188 = scmp.eq.s32.totalorder %s29, 0
      %p189 = por %p187, %p188
      %p190 = scmp.ne.s32.totalorder %s182, %s184
      %p191 = scmp.eq.s32.totalorder %s34, 1
      %p192 = por %p190, %p191
      %p193 = scmp.ne.s32.totalorder %s184, %s185
      %p194 = scmp.eq.s32.totalorder %s34, 0
      %p195 = por %p193, %p194
      %p196 = scmp.ne.s32.totalorder %s184, %s185
      %p197 = scmp.eq.s32.totalorder %s35, 1
      %p198 = por %p196, %p197
      %p200 = scmp.ne.s32.totalorder %s185, %s199
      %p201 = scmp.eq.s32.totalorder %s35, 0
      %p202 = por %p200, %p201
      %s204 = sadd.s32 %s203, 1
      %p207 = scmp.eq.s32.totalorder %s29, 1
      %p208 = scmp.ne.s32.totalorder %s203, %s205
      %p209 = scmp.eq.s32.totalorder %s29, 0
      %p210 = por %p208, %p209
      %p211 = scmp.ne.s32.totalorder %s203, %s205
      %p212 = scmp.eq.s32.totalorder %s34, 1
      %p213 = por %p211, %p212
      %p214 = scmp.ne.s32.totalorder %s205, %s206
      %p215 = scmp.eq.s32.totalorder %s34, 0
      %p216 = por %p214, %p215
      %p217 = scmp.ne.s32.totalorder %s205, %s206
      %p218 = scmp.eq.s32.totalorder %s35, 1
      %p219 = por %p217, %p218
      %p221 = scmp.ne.s32.totalorder %s206, %s220
      %p222 = scmp.eq.s32.totalorder %s35, 0
      %p223 = por %p221, %p222
      %s225 = sadd.s32 %s224, 1
      %p228 = scmp.eq.s32.totalorder %s29, 1
      %p229 = scmp.ne.s32.totalorder %s224, %s226
      %p230 = scmp.eq.s32.totalorder %s29, 0
      %p231 = por %p229, %p230
      %p232 = scmp.ne.s32.totalorder %s224, %s226
      %p233 = scmp.eq.s32.totalorder %s34, 1
      %p234 = por %p232, %p233
      %p235 = scmp.ne.s32.totalorder %s226, %s227
      %p236 = scmp.eq.s32.totalorder %s34, 0
      %p237 = por %p235, %p236
      %p238 = scmp.ne.s32.totalorder %s226, %s227
      %p239 = scmp.eq.s32.totalorder %s35, 1
      %p240 = por %p238, %p239
      %p242 = scmp.ne.s32.totalorder %s227, %s241
      %p243 = scmp.eq.s32.totalorder %s35, 0
      %p244 = por %p242, %p243
      %s245 = ssub.s32 %s36, %s48
      %s246 = ssub.s32 %s37, %s44
      %s247 = sor.u32 %s245, %s246
      %p248 = scmp.eq.s32.totalorder %s247, 0
      %s250 = sadd.s32 %s249, 1
      %s251 = scalar_select %p248, %s249, %s250
      %p254 = pneg %p248
      %p255 = scmp.eq.s32.totalorder %s29, 1
      %p256 = por %p254, %p255
      %p257 = scmp.ne.s32.totalorder %s249, %s252
      %p258 = scmp.eq.s32.totalorder %s29, 0
      %p259 = por %p257, %p258
      %p260 = scmp.ne.s32.totalorder %s249, %s252
      %p261 = scmp.eq.s32.totalorder %s34, 1
      %p262 = por %p260, %p261
      %p263 = scmp.ne.s32.totalorder %s252, %s253
      %p264 = scmp.eq.s32.totalorder %s34, 0
      %p265 = por %p263, %p264
      %p266 = scmp.ne.s32.totalorder %s252, %s253
      %p267 = scmp.eq.s32.totalorder %s35, 1
      %p268 = por %p266, %p267
      %p270 = scmp.ne.s32.totalorder %s253, %s269
      %p271 = scmp.eq.s32.totalorder %s35, 0
      %p272 = por %p270, %p271
      %s273 = ssub.s32 %s36, %s48
      %s274 = ssub.s32 %s37, %s44
      %s275 = sor.u32 %s273, %s274
      %p276 = scmp.eq.s32.totalorder %s275, 0
      %s278 = sadd.s32 %s277, 1
      %s279 = scalar_select %p276, %s277, %s278
      %p282 = pneg %p276
      %p283 = scmp.eq.s32.totalorder %s29, 1
      %p284 = por %p282, %p283
      %p285 = scmp.ne.s32.totalorder %s277, %s280
      %p286 = scmp.eq.s32.totalorder %s29, 0
      %p287 = por %p285, %p286
      %p288 = scmp.ne.s32.totalorder %s277, %s280
      %p289 = scmp.eq.s32.totalorder %s34, 1
      %p290 = por %p288, %p289
      %p291 = scmp.ne.s32.totalorder %s280, %s281
      %p292 = scmp.eq.s32.totalorder %s34, 0
      %p293 = por %p291, %p292
      %p294 = scmp.ne.s32.totalorder %s280, %s281
      %p295 = scmp.eq.s32.totalorder %s35, 1
      %p296 = por %p294, %p295
      %p298 = scmp.ne.s32.totalorder %s281, %s297
      %p299 = scmp.eq.s32.totalorder %s35, 0
      %p300 = por %p298, %p299
      %s301 = ssub.s32 %s36, %s48
      %s302 = ssub.s32 %s37, %s44
      %s303 = sor.u32 %s301, %s302
      %p304 = scmp.eq.s32.totalorder %s303, 0
      %s306 = sadd.s32 %s305, 1
      %s307 = scalar_select %p304, %s305, %s306
      %p310 = pneg %p304
      %p311 = scmp.eq.s32.totalorder %s29, 1
      %p312 = por %p310, %p311
      %p313 = scmp.ne.s32.totalorder %s305, %s308
      %p314 = scmp.eq.s32.totalorder %s29, 0
      %p315 = por %p313, %p314
      %p316 = scmp.ne.s32.totalorder %s305, %s308
      %p317 = scmp.eq.s32.totalorder %s34, 1
      %p318 = por %p316, %p317
      %p319 = scmp.ne.s32.totalorder %s308, %s309
      %p320 = scmp.eq.s32.totalorder %s34, 0
      %p321 = por %p319, %p320
      %p322 = scmp.ne.s32.totalorder %s308, %s309
      %p323 = scmp.eq.s32.totalorder %s35, 1
      %p324 = por %p322, %p323
      %p326 = scmp.ne.s32.totalorder %s309, %s325
      %p327 = scmp.eq.s32.totalorder %s35, 0
      %p328 = por %p326, %p327
      %p329 = scmp.le.s32.totalorder 1, %s29
      %p330 = scmp.lt.s32.totalorder %s29, 3
      %p331 = pnand %p329, %p330
      %p332 = pneg %p331
      // Predicated region
      $region9: #{tpu_custom_call.1} parent=5 // pred_check
        _
      $region10: #{tpu_custom_call.1} parent=5 // pred_check_branch
        %334 = sbr.rel (%p331) target = $region12
      $region11: #{tpu_custom_call.1} parent=5 // pred_region
        %s335 = ssub.s32 %s29, 1
        // Predicated region
        $region13: #{tpu_custom_call.1} parent=11 // pred_check
          %p336 = pneg %p90
        $region14: #{tpu_custom_call.1} parent=11 // pred_check_branch
          %338 = sbr.rel (%p336) target = $region16
        $region15: #{tpu_custom_call.1} parent=11 // pred_region
          _
        $region16: #{tpu_custom_call.1} parent=11 // pred_fallthru
          _
        // Predicated region
        $region17: #{tpu_custom_call.1} parent=11 // pred_check
          %p339 = pneg %p111
        $region18: #{tpu_custom_call.1} parent=11 // pred_check_branch
          %341 = sbr.rel (%p339) target = $region20
        $region19: #{tpu_custom_call.1} parent=11 // pred_region
          %s343 = ssub.s32 16, 16
          %344 = vsyncadd [#allocation6], %s343
          %s346 = sshll.u32 [#allocation5], 4
          %s347 = int_to_ptr.vmem [resolvable:$true] %s346
          %349 = dma.hbm_to_vmem [thread:$0]  %s2, 16, %s347, [#allocation6]
        $region20: #{tpu_custom_call.1} parent=11 // pred_fallthru
          _
        // Predicated region
        $region21: #{tpu_custom_call.1} parent=11 // pred_check
          %p350 = pneg %p132
        $region22: #{tpu_custom_call.1} parent=11 // pred_check_branch
          %352 = sbr.rel (%p350) target = $region24
        $region23: #{tpu_custom_call.1} parent=11 // pred_region
          %s354 = ssub.s32 2048, 2048
          %355 = vsyncadd [#allocation6], %s354
          %s356 = sshll.u32 [#allocation7], 4
          %s357 = int_to_ptr.vmem [resolvable:$true] %s356
          %362 = dma.hbm_to_vmem [thread:$0]  %s3, 2048, %s357, [#allocation6], 128, 128, 8
        $region24: #{tpu_custom_call.1} parent=11 // pred_fallthru
          _
        // Predicated region
        $region25: #{tpu_custom_call.1} parent=11 // pred_check
          %p363 = pneg %p153
        $region26: #{tpu_custom_call.1} parent=11 // pred_check_branch
          %365 = sbr.rel (%p363) target = $region28
        $region27: #{tpu_custom_call.1} parent=11 // pred_region
          _
        $region28: #{tpu_custom_call.1} parent=11 // pred_fallthru
          _
        // Predicated region
        $region29: #{tpu_custom_call.1} parent=11 // pred_check
          %p366 = pneg %p174
        $region30: #{tpu_custom_call.1} parent=11 // pred_check_branch
          %368 = sbr.rel (%p366) target = $region32
        $region31: #{tpu_custom_call.1} parent=11 // pred_region
          %s370 = ssub.s32 2048, 2048
          %371 = vsyncadd [#allocation9], %s370
          %s372 = sshll.u32 [#allocation8], 4
          %s373 = int_to_ptr.vmem [resolvable:$true] %s372
          %378 = dma.hbm_to_vmem [thread:$0]  %s5, 2048, %s373, [#allocation9], 128, 128, 8
        $region32: #{tpu_custom_call.1} parent=11 // pred_fallthru
          _
        // Predicated region
        $region33: #{tpu_custom_call.1} parent=11 // pred_check
          %p379 = pneg %p195
        $region34: #{tpu_custom_call.1} parent=11 // pred_check_branch
          %381 = sbr.rel (%p379) target = $region36
        $region35: #{tpu_custom_call.1} parent=11 // pred_region
          _
        $region36: #{tpu_custom_call.1} parent=11 // pred_fallthru
          _
        // Predicated region
        $region37: #{tpu_custom_call.1} parent=11 // pred_check
          %p382 = pneg %p216
        $region38: #{tpu_custom_call.1} parent=11 // pred_check_branch
          %384 = sbr.rel (%p382) target = $region40
        $region39: #{tpu_custom_call.1} parent=11 // pred_region
          %s386 = ssub.s32 2048, 2048
          %387 = vsyncadd [#allocation9], %s386
          %s388 = sshll.u32 [#allocation10], 4
          %s389 = int_to_ptr.vmem [resolvable:$true] %s388
          %394 = dma.hbm_to_vmem [thread:$0]  %s7, 2048, %s389, [#allocation9], 128, 128, 8
        $region40: #{tpu_custom_call.1} parent=11 // pred_fallthru
          _
        // Predicated region
        $region41: #{tpu_custom_call.1} parent=11 // pred_check
          %p395 = pneg %p237
        $region42: #{tpu_custom_call.1} parent=11 // pred_check_branch
          %397 = sbr.rel (%p395) target = $region44
        $region43: #{tpu_custom_call.1} parent=11 // pred_region
          _
        $region44: #{tpu_custom_call.1} parent=11 // pred_fallthru
          _
      $region12: #{tpu_custom_call.1} parent=5 // pred_fallthru
        _
      %p398 = scmp.lt.s32.totalorder %s29, 2
      // Predicated region
      $region45: #{tpu_custom_call.1} parent=5 // pred_check
        %p399 = pneg %p398
      $region46: #{tpu_custom_call.1} parent=5 // pred_check_branch
        %401 = sbr.rel (%p399) target = $region48
      $region47: #{tpu_custom_call.1} parent=5 // pred_region
        // Predicated region
        $region49: #{tpu_custom_call.1} parent=47 // pred_check
          %p402 = pneg %p63
        $region50: #{tpu_custom_call.1} parent=47 // pred_check_branch
          %404 = sbr.rel (%p402) target = $region52
        $region51: #{tpu_custom_call.1} parent=47 // pred_region
          %s405 = sand.u32 %s53, 1
          %s406 = scalar_lea.sflag [#allocation3], %s405
          %s407 = sand.u32 %s53, 1
          %s408 = smul.addr %s407, 16
          %s409 = scalar_lea.vmem [#allocation2], %s408
          %s410 = smul.u32 2, %s37
          %s412 = ssub.s32 256, 256
          %413 = vsyncadd %s406, %s412
          %s414 = smul.addr %s36, 2
          %s415 = sadd.s32 %s410, %s414
          %s416 = smul.addr %s415, 128
          %s417 = scalar_lea.hbm %s0, %s416
          %s418 = sshll.u32 %s409, 4
          %s419 = int_to_ptr.vmem [resolvable:$true] %s418
          %424 = dma.hbm_to_vmem [thread:$0]  %s417, 256, %s419, %s406, 128, 128, 8
        $region52: #{tpu_custom_call.1} parent=47 // pred_fallthru
          _
      $region48: #{tpu_custom_call.1} parent=5 // pred_fallthru
        _
      %p425 = scmp.le.s32.totalorder 1, %s29
      %p426 = scmp.lt.s32.totalorder %s29, 3
      %p427 = pnand %p425, %p426
      %p428 = pneg %p427
      // Predicated region
      $region53: #{tpu_custom_call.1} parent=5 // pred_check
        _
      $region54: #{tpu_custom_call.1} parent=5 // pred_check_branch
        %430 = sbr.rel (%p427) target = $region56
      $region55: #{tpu_custom_call.1} parent=5 // pred_region
        %s431 = ssub.s32 %s29, 1
        %s432 = sand.u32 %s56, 1
        %s433 = scalar_lea.sflag [#allocation3], %s432
        %s434 = sand.u32 %s56, 1
        %s435 = smul.addr %s434, 16
        %s436 = scalar_lea.vmem [#allocation2], %s435
        // Predicated region
        $region57: #{tpu_custom_call.1} parent=55 // pred_check
          %p437 = pneg %p69
        $region58: #{tpu_custom_call.1} parent=55 // pred_check_branch
          %439 = sbr.rel (%p437) target = $region60
        $region59: #{tpu_custom_call.1} parent=55 // pred_region
          %440 = dma.done %s433, 256
        $region60: #{tpu_custom_call.1} parent=55 // pred_fallthru
          _
        // Predicated region
        $region61: #{tpu_custom_call.1} parent=55 // pred_check
          %p441 = pneg %p111
        $region62: #{tpu_custom_call.1} parent=55 // pred_check_branch
          %443 = sbr.rel (%p441) target = $region64
        $region63: #{tpu_custom_call.1} parent=55 // pred_region
          %444 = dma.done [#allocation6], 16
        $region64: #{tpu_custom_call.1} parent=55 // pred_fallthru
          _
        // Predicated region
        $region65: #{tpu_custom_call.1} parent=55 // pred_check
          %p445 = pneg %p132
        $region66: #{tpu_custom_call.1} parent=55 // pred_check_branch
          %447 = sbr.rel (%p445) target = $region68
        $region67: #{tpu_custom_call.1} parent=55 // pred_region
          %448 = dma.done [#allocation6], 2048
        $region68: #{tpu_custom_call.1} parent=55 // pred_fallthru
          _
        // Predicated region
        $region69: #{tpu_custom_call.1} parent=55 // pred_check
          %p449 = pneg %p174
        $region70: #{tpu_custom_call.1} parent=55 // pred_check_branch
          %451 = sbr.rel (%p449) target = $region72
        $region71: #{tpu_custom_call.1} parent=55 // pred_region
          %452 = dma.done [#allocation9], 2048
        $region72: #{tpu_custom_call.1} parent=55 // pred_fallthru
          _
        // Predicated region
        $region73: #{tpu_custom_call.1} parent=55 // pred_check
          %p453 = pneg %p216
        $region74: #{tpu_custom_call.1} parent=55 // pred_check_branch
          %455 = sbr.rel (%p453) target = $region76
        $region75: #{tpu_custom_call.1} parent=55 // pred_region
          %456 = dma.done [#allocation9], 2048
        $region76: #{tpu_custom_call.1} parent=55 // pred_fallthru
          _
        %s457 = sand.u32 %s56, 1
        %s458 = scalar_lea.sflag [#allocation3], %s457
        %s459 = sand.u32 %s56, 1
        %s460 = smul.addr %s459, 16
        %s461 = scalar_lea.vmem [#allocation2], %s460
        %p462 = pneg %p69
        %p463 = pneg %p66
        %p464 = pneg %p90
        %p465 = pneg %p87
        %p466 = pneg %p111
        %p467 = pneg %p108
        %p468 = pneg %p132
        %p469 = pneg %p129
        %p470 = pneg %p153
        %p471 = pneg %p150
        %p472 = pneg %p174
        %p473 = pneg %p171
        %p474 = pneg %p195
        %p475 = pneg %p192
        %p476 = pneg %p216
        %p477 = pneg %p213
        %p478 = pneg %p237
        %p479 = pneg %p234
        %p480 = pneg %p265
        %p481 = pneg %p262
        %s482 = sand.u32 %s252, 1
        %s483 = scalar_lea.sflag [#allocation4], %s482
        %s484 = sand.u32 %s252, 1
        %s485 = smul.addr %s484, 16
        %s486 = scalar_lea.vmem [#allocation11], %s485
        %p487 = pneg %p293
        %p488 = pneg %p290
        %s489 = sand.u32 %s34, 1
        %s490 = scalar_lea.sflag [#allocation13], %s489
        %s491 = sand.u32 %s280, 1
        %s492 = smul.addr %s491, 16
        %s493 = scalar_lea.vmem [#allocation12], %s492
        %p494 = pneg %p321
        %p495 = pneg %p318
        %s496 = sand.u32 %s34, 1
        %s497 = scalar_lea.sflag [#allocation13], %s496
        %s498 = sand.u32 %s308, 1
        %s499 = smul.addr %s498, 16
        %s500 = scalar_lea.vmem [#allocation14], %s499
        %s501 = smul.u32 2, %s39
        %s502 = smul.u32 2, %s39
        %s503 = smul.u32 2, %s39
        %s504 = smul.u32 2, %s39
        %v506 = vld [vmem:[%s436] sm:$0xff]
        %v507 = vld [vmem:[%s436 + $0x8] sm:$0xff]
        %508 = vadd.xlane.f32.xlu0 %v506
        %v509 = vpop.xlane.xlu0 %508
        %510 = vadd.xlane.f32.xlu0 %v507
        %v511 = vpop.xlane.xlu0 %510
        %v512 = vrcp.pop 128.0
        %v513 = vmul.f32 %v509, %v512
        %v514 = vmul.f32 %v511, %v512
        %v515 = vsub.f32 %v506, %v513
        %v516 = vsub.f32 %v507, %v514
        %v517 = vmul.f32 %v515, %v515
        %v518 = vmul.f32 %v516, %v516
        %519 = vadd.xlane.f32.xlu0 %v517
        %v520 = vpop.xlane.xlu0 %519
        %521 = vadd.xlane.f32.xlu0 %v518
        %v522 = vpop.xlane.xlu0 %521
        %v523 = vmul.f32 %v520, %v512
        %v524 = vmul.f32 %v522, %v512
        %v525 = vadd.f32 %v523, 1e-05
        %v526 = vadd.f32 %v524, 1e-05
        %v527 = vrsqrt.pop %v525
        %v528 = vrsqrt.pop %v526
        %v529 = vmul.f32 %v515, %v527
        %v530 = vmul.f32 %v516, %v528
        %v531 = vld [vmem:[%s1] sm:$0x1]
        %v533 = vlaneseq
        %v534 = vshrl.u32 %v533, 7
        %v535 = vsub.s32 0, %v534
        %v536 = vrot.slane %v531, %v535
        %v538 = vmul.f32 %v529, %v536
        %v539 = vmul.f32 %v530, %v536
        %v540 = vld [vmem:[#allocation5] sm:$0x1]
        %v542 = vlaneseq
        %v543 = vshrl.u32 %v542, 7
        %v544 = vsub.s32 0, %v543
        %v545 = vrot.slane %v540, %v544
        %v547 = vadd.f32 %v538, %v545
        %v548 = vadd.f32 %v539, %v545
        %v549 = vpack.c.bf16 %v548, %v547
        %v550 = vld [vmem:[#allocation7] sm:$0xff]
        %v551 = vld [vmem:[#allocation7 + $0x8] sm:$0xff]
        %v552 = vld [vmem:[#allocation7 + $0x10] sm:$0xff]
        %v553 = vld [vmem:[#allocation7 + $0x18] sm:$0xff]
        %v554 = vld [vmem:[#allocation7 + $0x20] sm:$0xff]
        %v555 = vld [vmem:[#allocation7 + $0x28] sm:$0xff]
        %v556 = vld [vmem:[#allocation7 + $0x30] sm:$0xff]
        %v557 = vld [vmem:[#allocation7 + $0x38] sm:$0xff]
        %v558 = vld [vmem:[#allocation7 + $0x40] sm:$0xff]
        %v559 = vld [vmem:[#allocation7 + $0x48] sm:$0xff]
        %v560 = vld [vmem:[#allocation7 + $0x50] sm:$0xff]
        %v561 = vld [vmem:[#allocation7 + $0x58] sm:$0xff]
        %v562 = vld [vmem:[#allocation7 + $0x60] sm:$0xff]
        %v563 = vld [vmem:[#allocation7 + $0x68] sm:$0xff]
        %v564 = vld [vmem:[#allocation7 + $0x70] sm:$0xff]
        %v565 = vld [vmem:[#allocation7 + $0x78] sm:$0xff]
        %v566 = vld [vmem:[%s4] sm:$0x3]
        %v568 = vlaneseq
        %v569 = vshrl.u32 %v568, 7
        %v570 = vsub.s32 0, %v569
        %v571 = vrot.slane %v566, %v570
        %v572 = vlaneseq
        %v573 = vshrl.u32 %v572, 7
        %v574 = vsub.s32 1, %v573
        %v575 = vrot.slane %v566, %v574
        %v594 = vunpack.c.l.b16 %v550
        %v595 = vunpack.c.h.b16 %v550
        %v596 = vunpack.c.l.b16 %v551
        %v597 = vunpack.c.h.b16 %v551
        %v598 = vunpack.c.l.b16 %v552
        %v599 = vunpack.c.h.b16 %v552
        %v600 = vunpack.c.l.b16 %v553
        %v601 = vunpack.c.h.b16 %v553
        %v602 = vunpack.c.l.b16 %v554
        %v603 = vunpack.c.h.b16 %v554
        %v604 = vunpack.c.l.b16 %v555
        %v605 = vunpack.c.h.b16 %v555
        %v606 = vunpack.c.l.b16 %v556
        %v607 = vunpack.c.h.b16 %v556
        %v608 = vunpack.c.l.b16 %v557
        %v609 = vunpack.c.h.b16 %v557
        %v610 = vunpack.c.l.b16 %v558
        %v611 = vunpack.c.h.b16 %v558
        %v612 = vunpack.c.l.b16 %v559
        %v613 = vunpack.c.h.b16 %v559
        %v614 = vunpack.c.l.b16 %v560
        %v615 = vunpack.c.h.b16 %v560
        %v616 = vunpack.c.l.b16 %v561
        %v617 = vunpack.c.h.b16 %v561
        %v618 = vunpack.c.l.b16 %v562
        %v619 = vunpack.c.h.b16 %v562
        %v620 = vunpack.c.l.b16 %v563
        %v621 = vunpack.c.h.b16 %v563
        %v622 = vunpack.c.l.b16 %v564
        %v623 = vunpack.c.h.b16 %v564
        %v624 = vunpack.c.l.b16 %v565
        %v625 = vunpack.c.h.b16 %v565
        %v626 = vpack.c.b16 %v596, %v594
        %v627 = vpack.c.b16 %v597, %v595
        %v628 = vpack.c.b16 %v600, %v598
        %v629 = vpack.c.b16 %v601, %v599
        %v630 = vpack.c.b16 %v604, %v602
        %v631 = vpack.c.b16 %v605, %v603
        %v632 = vpack.c.b16 %v608, %v606
        %v633 = vpack.c.b16 %v609, %v607
        %v634 = vpack.c.b16 %v612, %v610
        %v635 = vpack.c.b16 %v613, %v611
        %v636 = vpack.c.b16 %v616, %v614
        %v637 = vpack.c.b16 %v617, %v615
        %v638 = vpack.c.b16 %v620, %v618
        %v639 = vpack.c.b16 %v621, %v619
        %v640 = vpack.c.b16 %v624, %v622
        %v641 = vpack.c.b16 %v625, %v623
        %658 = vmatprep.subr.bf16.mxu0 %v627
        %659 = vmatpush1.bf16.msra.mxu0 %v626
        %660 = vmatprep.subr.bf16.mxu0 %v629
        %661 = vmatpush1.bf16.msra.mxu0 %v628
        %662 = vmatprep.subr.bf16.mxu0 %v631
        %663 = vmatpush1.bf16.msra.mxu0 %v630
        %664 = vmatprep.subr.bf16.mxu0 %v633
        %665 = vmatpush1.bf16.msra.mxu0 %v632
        %666 = vmatprep.subr.bf16.mxu0 %v635
        %667 = vmatpush1.bf16.msra.mxu0 %v634
        %668 = vmatprep.subr.bf16.mxu0 %v637
        %669 = vmatpush1.bf16.msra.mxu0 %v636
        %670 = vmatprep.subr.bf16.mxu0 %v639
        %671 = vmatpush1.bf16.msra.mxu0 %v638
        %672 = vmatprep.subr.bf16.mxu0 %v641
        %673 = vmatpush1.bf16.msra.mxu0 %v640
        %674 = vmatprep.subr.bf16.mxu0 0
        %675 = vmatpush1.bf16.msra.mxu0 0
        %676 = vmatprep.subr.bf16.mxu0 0
        %677 = vmatpush1.bf16.msra.mxu0 0
        %678 = vmatprep.subr.bf16.mxu0 0
        %679 = vmatpush1.bf16.msra.mxu0 0
        %680 = vmatprep.subr.bf16.mxu0 0
        %681 = vmatpush1.bf16.msra.mxu0 0
        %682 = vmatprep.subr.bf16.mxu0 0
        %683 = vmatpush1.bf16.msra.mxu0 0
        %684 = vmatprep.subr.bf16.mxu0 0
        %685 = vmatpush1.bf16.msra.mxu0 0
        %686 = vmatprep.subr.bf16.mxu0 0
        %687 = vmatpush1.bf16.msra.mxu0 0
        %688 = vmatprep.subr.bf16.mxu0 0
        %689 = vmatpush1.bf16.msra.mxu0 0
        %690 = vmatprep.mubr.bf16.mxu0 0
        %691 = vmatmul.mubr.bf16.gmra.mrb[0].mxu0 %v549
        %v692 = vpop.f32.mrb[0].mxu0
        %v693 = vadd.f32 %v571, %v692
        %v694 = vpop.f32.mrb[0].mxu0
        %v695 = vadd.f32 %v575, %v694
        %v696 = vpop.f32.mrb[0].mxu0
        %v697 = vadd.f32 %v571, %v696
        %v698 = vpop.f32.mrb[0].mxu0
        %v699 = vadd.f32 %v575, %v698
        %700 = vdwg.mxu0
        %v701 = vpack.c.bf16 %v697, %v693
        %v702 = vpack.c.bf16 %v699, %v695
        %v705 = vunpack.c.l.b16 %v701
        %v706 = vunpack.c.l.b16 %v702
        %v707 = vunpack.c.h.b16 %v701
        %v708 = vunpack.c.h.b16 %v702
        %v709 = vpack.c.b16 %v706, %v705
        %v710 = vpack.c.b16 %v708, %v707
        %713 = vst [vmem:[%s486] sm:$0xff] %v709
        %714 = vst [vmem:[%s486 + $0x8] sm:$0xff] %v710
        %v715 = vld [vmem:[#allocation8] sm:$0xff]
        %v716 = vld [vmem:[#allocation8 + $0x8] sm:$0xff]
        %v717 = vld [vmem:[#allocation8 + $0x10] sm:$0xff]
        %v718 = vld [vmem:[#allocation8 + $0x18] sm:$0xff]
        %v719 = vld [vmem:[#allocation8 + $0x20] sm:$0xff]
        %v720 = vld [vmem:[#allocation8 + $0x28] sm:$0xff]
        %v721 = vld [vmem:[#allocation8 + $0x30] sm:$0xff]
        %v722 = vld [vmem:[#allocation8 + $0x38] sm:$0xff]
        %v723 = vld [vmem:[#allocation8 + $0x40] sm:$0xff]
        %v724 = vld [vmem:[#allocation8 + $0x48] sm:$0xff]
        %v725 = vld [vmem:[#allocation8 + $0x50] sm:$0xff]
        %v726 = vld [vmem:[#allocation8 + $0x58] sm:$0xff]
        %v727 = vld [vmem:[#allocation8 + $0x60] sm:$0xff]
        %v728 = vld [vmem:[#allocation8 + $0x68] sm:$0xff]
        %v729 = vld [vmem:[#allocation8 + $0x70] sm:$0xff]
        %v730 = vld [vmem:[#allocation8 + $0x78] sm:$0xff]
        %v731 = vld [vmem:[%s6] sm:$0x3]
        %v733 = vlaneseq
        %v734 = vshrl.u32 %v733, 7
        %v735 = vsub.s32 0, %v734
        %v736 = vrot.slane %v731, %v735
        %v737 = vlaneseq
        %v738 = vshrl.u32 %v737, 7
        %v739 = vsub.s32 1, %v738
        %v740 = vrot.slane %v731, %v739
        %v759 = vunpack.c.l.b16 %v715
        %v760 = vunpack.c.h.b16 %v715
        %v761 = vunpack.c.l.b16 %v716
        %v762 = vunpack.c.h.b16 %v716
        %v763 = vunpack.c.l.b16 %v717
        %v764 = vunpack.c.h.b16 %v717
        %v765 = vunpack.c.l.b16 %v718
        %v766 = vunpack.c.h.b16 %v718
        %v767 = vunpack.c.l.b16 %v719
        %v768 = vunpack.c.h.b16 %v719
        %v769 = vunpack.c.l.b16 %v720
        %v770 = vunpack.c.h.b16 %v720
        %v771 = vunpack.c.l.b16 %v721
        %v772 = vunpack.c.h.b16 %v721
        %v773 = vunpack.c.l.b16 %v722
        %v774 = vunpack.c.h.b16 %v722
        %v775 = vunpack.c.l.b16 %v723
        %v776 = vunpack.c.h.b16 %v723
        %v777 = vunpack.c.l.b16 %v724
        %v778 = vunpack.c.h.b16 %v724
        %v779 = vunpack.c.l.b16 %v725
        %v780 = vunpack.c.h.b16 %v725
        %v781 = vunpack.c.l.b16 %v726
        %v782 = vunpack.c.h.b16 %v726
        %v783 = vunpack.c.l.b16 %v727
        %v784 = vunpack.c.h.b16 %v727
        %v785 = vunpack.c.l.b16 %v728
        %v786 = vunpack.c.h.b16 %v728
        %v787 = vunpack.c.l.b16 %v729
        %v788 = vunpack.c.h.b16 %v729
        %v789 = vunpack.c.l.b16 %v730
        %v790 = vunpack.c.h.b16 %v730
        %v791 = vpack.c.b16 %v761, %v759
        %v792 = vpack.c.b16 %v762, %v760
        %v793 = vpack.c.b16 %v765, %v763
        %v794 = vpack.c.b16 %v766, %v764
        %v795 = vpack.c.b16 %v769, %v767
        %v796 = vpack.c.b16 %v770, %v768
        %v797 = vpack.c.b16 %v773, %v771
        %v798 = vpack.c.b16 %v774, %v772
        %v799 = vpack.c.b16 %v777, %v775
        %v800 = vpack.c.b16 %v778, %v776
        %v801 = vpack.c.b16 %v781, %v779
        %v802 = vpack.c.b16 %v782, %v780
        %v803 = vpack.c.b16 %v785, %v783
        %v804 = vpack.c.b16 %v786, %v784
        %v805 = vpack.c.b16 %v789, %v787
        %v806 = vpack.c.b16 %v790, %v788
        %823 = vmatprep.subr.bf16.mxu0 %v792
        %824 = vmatpush1.bf16.msra.mxu0 %v791
        %825 = vmatprep.subr.bf16.mxu0 %v794
        %826 = vmatpush1.bf16.msra.mxu0 %v793
        %827 = vmatprep.subr.bf16.mxu0 %v796
        %828 = vmatpush1.bf16.msra.mxu0 %v795
        %829 = vmatprep.subr.bf16.mxu0 %v798
        %830 = vmatpush1.bf16.msra.mxu0 %v797
        %831 = vmatprep.subr.bf16.mxu0 %v800
        %832 = vmatpush1.bf16.msra.mxu0 %v799
        %833 = vmatprep.subr.bf16.mxu0 %v802
        %834 = vmatpush1.bf16.msra.mxu0 %v801
        %835 = vmatprep.subr.bf16.mxu0 %v804
        %836 = vmatpush1.bf16.msra.mxu0 %v803
        %837 = vmatprep.subr.bf16.mxu0 %v806
        %838 = vmatpush1.bf16.msra.mxu0 %v805
        %839 = vmatprep.subr.bf16.mxu0 0
        %840 = vmatpush1.bf16.msra.mxu0 0
        %841 = vmatprep.subr.bf16.mxu0 0
        %842 = vmatpush1.bf16.msra.mxu0 0
        %843 = vmatprep.subr.bf16.mxu0 0
        %844 = vmatpush1.bf16.msra.mxu0 0
        %845 = vmatprep.subr.bf16.mxu0 0
        %846 = vmatpush1.bf16.msra.mxu0 0
        %847 = vmatprep.subr.bf16.mxu0 0
        %848 = vmatpush1.bf16.msra.mxu0 0
        %849 = vmatprep.subr.bf16.mxu0 0
        %850 = vmatpush1.bf16.msra.mxu0 0
        %851 = vmatprep.subr.bf16.mxu0 0
        %852 = vmatpush1.bf16.msra.mxu0 0
        %853 = vmatprep.subr.bf16.mxu0 0
        %854 = vmatpush1.bf16.msra.mxu0 0
        %855 = vmatprep.mubr.bf16.mxu0 0
        %856 = vmatmul.mubr.bf16.gmra.mrb[0].mxu0 %v549
        %v857 = vpop.f32.mrb[0].mxu0
        %v858 = vadd.f32 %v736, %v857
        %v859 = vpop.f32.mrb[0].mxu0
        %v860 = vadd.f32 %v740, %v859
        %v861 = vpop.f32.mrb[0].mxu0
        %v862 = vadd.f32 %v736, %v861
        %v863 = vpop.f32.mrb[0].mxu0
        %v864 = vadd.f32 %v740, %v863
        %865 = vdwg.mxu0
        %v866 = vpack.c.bf16 %v862, %v858
        %v867 = vpack.c.bf16 %v864, %v860
        %v870 = vunpack.c.l.b16 %v866
        %v871 = vunpack.c.l.b16 %v867
        %v872 = vunpack.c.h.b16 %v866
        %v873 = vunpack.c.h.b16 %v867
        %v874 = vpack.c.b16 %v871, %v870
        %v875 = vpack.c.b16 %v873, %v872
        %878 = vst [vmem:[%s493] sm:$0xff] %v874
        %879 = vst [vmem:[%s493 + $0x8] sm:$0xff] %v875
        %v880 = vld [vmem:[#allocation10] sm:$0xff]
        %v881 = vld [vmem:[#allocation10 + $0x8] sm:$0xff]
        %v882 = vld [vmem:[#allocation10 + $0x10] sm:$0xff]
        %v883 = vld [vmem:[#allocation10 + $0x18] sm:$0xff]
        %v884 = vld [vmem:[#allocation10 + $0x20] sm:$0xff]
        %v885 = vld [vmem:[#allocation10 + $0x28] sm:$0xff]
        %v886 = vld [vmem:[#allocation10 + $0x30] sm:$0xff]
        %v887 = vld [vmem:[#allocation10 + $0x38] sm:$0xff]
        %v888 = vld [vmem:[#allocation10 + $0x40] sm:$0xff]
        %v889 = vld [vmem:[#allocation10 + $0x48] sm:$0xff]
        %v890 = vld [vmem:[#allocation10 + $0x50] sm:$0xff]
        %v891 = vld [vmem:[#allocation10 + $0x58] sm:$0xff]
        %v892 = vld [vmem:[#allocation10 + $0x60] sm:$0xff]
        %v893 = vld [vmem:[#allocation10 + $0x68] sm:$0xff]
        %v894 = vld [vmem:[#allocation10 + $0x70] sm:$0xff]
        %v895 = vld [vmem:[#allocation10 + $0x78] sm:$0xff]
        %v896 = vld [vmem:[%s8] sm:$0x3]
        %v898 = vlaneseq
        %v899 = vshrl.u32 %v898, 7
        %v900 = vsub.s32 0, %v899
        %v901 = vrot.slane %v896, %v900
        %v902 = vlaneseq
        %v903 = vshrl.u32 %v902, 7
        %v904 = vsub.s32 1, %v903
        %v905 = vrot.slane %v896, %v904
        %v924 = vunpack.c.l.b16 %v880
        %v925 = vunpack.c.h.b16 %v880
        %v926 = vunpack.c.l.b16 %v881
        %v927 = vunpack.c.h.b16 %v881
        %v928 = vunpack.c.l.b16 %v882
        %v929 = vunpack.c.h.b16 %v882
        %v930 = vunpack.c.l.b16 %v883
        %v931 = vunpack.c.h.b16 %v883
        %v932 = vunpack.c.l.b16 %v884
        %v933 = vunpack.c.h.b16 %v884
        %v934 = vunpack.c.l.b16 %v885
        %v935 = vunpack.c.h.b16 %v885
        %v936 = vunpack.c.l.b16 %v886
        %v937 = vunpack.c.h.b16 %v886
        %v938 = vunpack.c.l.b16 %v887
        %v939 = vunpack.c.h.b16 %v887
        %v940 = vunpack.c.l.b16 %v888
        %v941 = vunpack.c.h.b16 %v888
        %v942 = vunpack.c.l.b16 %v889
        %v943 = vunpack.c.h.b16 %v889
        %v944 = vunpack.c.l.b16 %v890
        %v945 = vunpack.c.h.b16 %v890
        %v946 = vunpack.c.l.b16 %v891
        %v947 = vunpack.c.h.b16 %v891
        %v948 = vunpack.c.l.b16 %v892
        %v949 = vunpack.c.h.b16 %v892
        %v950 = vunpack.c.l.b16 %v893
        %v951 = vunpack.c.h.b16 %v893
        %v952 = vunpack.c.l.b16 %v894
        %v953 = vunpack.c.h.b16 %v894
        %v954 = vunpack.c.l.b16 %v895
        %v955 = vunpack.c.h.b16 %v895
        %v956 = vpack.c.b16 %v926, %v924
        %v957 = vpack.c.b16 %v927, %v925
        %v958 = vpack.c.b16 %v930, %v928
        %v959 = vpack.c.b16 %v931, %v929
        %v960 = vpack.c.b16 %v934, %v932
        %v961 = vpack.c.b16 %v935, %v933
        %v962 = vpack.c.b16 %v938, %v936
        %v963 = vpack.c.b16 %v939, %v937
        %v964 = vpack.c.b16 %v942, %v940
        %v965 = vpack.c.b16 %v943, %v941
        %v966 = vpack.c.b16 %v946, %v944
        %v967 = vpack.c.b16 %v947, %v945
        %v968 = vpack.c.b16 %v950, %v948
        %v969 = vpack.c.b16 %v951, %v949
        %v970 = vpack.c.b16 %v954, %v952
        %v971 = vpack.c.b16 %v955, %v953
        %988 = vmatprep.subr.bf16.mxu0 %v957
        %989 = vmatpush1.bf16.msra.mxu0 %v956
        %990 = vmatprep.subr.bf16.mxu0 %v959
        %991 = vmatpush1.bf16.msra.mxu0 %v958
        %992 = vmatprep.subr.bf16.mxu0 %v961
        %993 = vmatpush1.bf16.msra.mxu0 %v960
        %994 = vmatprep.subr.bf16.mxu0 %v963
        %995 = vmatpush1.bf16.msra.mxu0 %v962
        %996 = vmatprep.subr.bf16.mxu0 %v965
        %997 = vmatpush1.bf16.msra.mxu0 %v964
        %998 = vmatprep.subr.bf16.mxu0 %v967
        %999 = vmatpush1.bf16.msra.mxu0 %v966
        %1000 = vmatprep.subr.bf16.mxu0 %v969
        %1001 = vmatpush1.bf16.msra.mxu0 %v968
        %1002 = vmatprep.subr.bf16.mxu0 %v971
        %1003 = vmatpush1.bf16.msra.mxu0 %v970
        %1004 = vmatprep.subr.bf16.mxu0 0
        %1005 = vmatpush1.bf16.msra.mxu0 0
        %1006 = vmatprep.subr.bf16.mxu0 0
        %1007 = vmatpush1.bf16.msra.mxu0 0
        %1008 = vmatprep.subr.bf16.mxu0 0
        %1009 = vmatpush1.bf16.msra.mxu0 0
        %1010 = vmatprep.subr.bf16.mxu0 0
        %1011 = vmatpush1.bf16.msra.mxu0 0
        %1012 = vmatprep.subr.bf16.mxu0 0
        %1013 = vmatpush1.bf16.msra.mxu0 0
        %1014 = vmatprep.subr.bf16.mxu0 0
        %1015 = vmatpush1.bf16.msra.mxu0 0
        %1016 = vmatprep.subr.bf16.mxu0 0
        %1017 = vmatpush1.bf16.msra.mxu0 0
        %1018 = vmatprep.subr.bf16.mxu0 0
        %1019 = vmatpush1.bf16.msra.mxu0 0
        %1020 = vmatprep.mubr.bf16.mxu0 0
        %1021 = vmatmul.mubr.bf16.gmra.mrb[0].mxu0 %v549
        %v1022 = vpop.f32.mrb[0].mxu0
        %v1023 = vadd.f32 %v901, %v1022
        %v1024 = vpop.f32.mrb[0].mxu0
        %v1025 = vadd.f32 %v905, %v1024
        %v1026 = vpop.f32.mrb[0].mxu0
        %v1027 = vadd.f32 %v901, %v1026
        %v1028 = vpop.f32.mrb[0].mxu0
        %v1029 = vadd.f32 %v905, %v1028
        %1030 = vdwg.mxu0
        %v1031 = vpack.c.bf16 %v1027, %v1023
        %v1032 = vpack.c.bf16 %v1029, %v1025
        %v1035 = vunpack.c.l.b16 %v1031
        %v1036 = vunpack.c.l.b16 %v1032
        %v1037 = vunpack.c.h.b16 %v1031
        %v1038 = vunpack.c.h.b16 %v1032
        %v1039 = vpack.c.b16 %v1036, %v1035
        %v1040 = vpack.c.b16 %v1038, %v1037
        %1043 = vst [vmem:[%s500] sm:$0xff] %v1039
        %1044 = vst [vmem:[%s500 + $0x8] sm:$0xff] %v1040
        %s1045 = sand.u32 %s252, 1
        %s1046 = scalar_lea.sflag [#allocation4], %s1045
        %s1047 = sand.u32 %s252, 1
        %s1048 = smul.addr %s1047, 16
        %s1049 = scalar_lea.vmem [#allocation11], %s1048
        %s1050 = sand.u32 %s34, 1
        %s1051 = scalar_lea.sflag [#allocation13], %s1050
        %s1052 = sand.u32 %s280, 1
        %s1053 = smul.addr %s1052, 16
        %s1054 = scalar_lea.vmem [#allocation12], %s1053
        %s1055 = sand.u32 %s34, 1
        %s1056 = scalar_lea.sflag [#allocation13], %s1055
        %s1057 = sand.u32 %s308, 1
        %s1058 = smul.addr %s1057, 16
        %s1059 = scalar_lea.vmem [#allocation14], %s1058
        // Predicated region
        $region77: #{tpu_custom_call.1} parent=55 // pred_check
          %p1060 = pneg %p262
        $region78: #{tpu_custom_call.1} parent=55 // pred_check_branch
          %1062 = sbr.rel (%p1060) target = $region80
        $region79: #{tpu_custom_call.1} parent=55 // pred_region
          %s1063 = smul.u32 2, %s39
          %s1065 = ssub.s32 256, 256
          %1066 = vsyncadd %s1046, %s1065
          %s1067 = smul.addr %s1063, 2
          %s1068 = smul.addr %s38, 4
          %s1069 = sadd.s32 %s1067, %s1068
          %s1070 = smul.addr %s1069, 64
          %s1071 = scalar_lea.hbm %s9, %s1070
          %s1072 = sshll.u32 %s1049, 4
          %s1073 = int_to_ptr.vmem [resolvable:$true] %s1072
          %1078 = dma.vmem_to_hbm [thread:$0]  %s1073, 256, %s1071, %s1046, 128, 128, 8
        $region80: #{tpu_custom_call.1} parent=55 // pred_fallthru
          _
        // Predicated region
        $region81: #{tpu_custom_call.1} parent=55 // pred_check
          %p1079 = pneg %p290
        $region82: #{tpu_custom_call.1} parent=55 // pred_check_branch
          %1081 = sbr.rel (%p1079) target = $region84
        $region83: #{tpu_custom_call.1} parent=55 // pred_region
          %s1082 = smul.u32 2, %s39
          %s1084 = ssub.s32 256, 256
          %1085 = vsyncadd %s1051, %s1084
          %s1086 = smul.addr %s1082, 2
          %s1087 = smul.addr %s38, 4
          %s1088 = sadd.s32 %s1086, %s1087
          %s1089 = smul.addr %s1088, 64
          %s1090 = scalar_lea.hbm %s10, %s1089
          %s1091 = sshll.u32 %s1054, 4
          %s1092 = int_to_ptr.vmem [resolvable:$true] %s1091
          %1097 = dma.vmem_to_hbm [thread:$0]  %s1092, 256, %s1090, %s1051, 128, 128, 8
        $region84: #{tpu_custom_call.1} parent=55 // pred_fallthru
          _
        // Predicated region
        $region85: #{tpu_custom_call.1} parent=55 // pred_check
          %p1098 = pneg %p318
        $region86: #{tpu_custom_call.1} parent=55 // pred_check_branch
          %1100 = sbr.rel (%p1098) target = $region88
        $region87: #{tpu_custom_call.1} parent=55 // pred_region
          %s1101 = smul.u32 2, %s39
          %s1103 = ssub.s32 256, 256
          %1104 = vsyncadd %s1056, %s1103
          %s1105 = smul.addr %s1101, 2
          %s1106 = smul.addr %s38, 4
          %s1107 = sadd.s32 %s1105, %s1106
          %s1108 = smul.addr %s1107, 64
          %s1109 = scalar_lea.hbm %s11, %s1108
          %s1110 = sshll.u32 %s1059, 4
          %s1111 = int_to_ptr.vmem [resolvable:$true] %s1110
          %1116 = dma.vmem_to_hbm [thread:$0]  %s1111, 256, %s1109, %s1056, 128, 128, 8
        $region88: #{tpu_custom_call.1} parent=55 // pred_fallthru
          _
      $region56: #{tpu_custom_call.1} parent=5 // pred_fallthru
        _
      %p1117 = scmp.le.s32.totalorder 2, %s29
      // Predicated region
      $region89: #{tpu_custom_call.1} parent=5 // pred_check
        %p1118 = pneg %p1117
      $region90: #{tpu_custom_call.1} parent=5 // pred_check_branch
        %1120 = sbr.rel (%p1118) target = $region92
      $region91: #{tpu_custom_call.1} parent=5 // pred_region
        %s1121 = ssub.s32 %s29, 2
        // Predicated region
        $region93: #{tpu_custom_call.1} parent=91 // pred_check
          %p1122 = pneg %p268
        $region94: #{tpu_custom_call.1} parent=91 // pred_check_branch
          %1124 = sbr.rel (%p1122) target = $region96
        $region95: #{tpu_custom_call.1} parent=91 // pred_region
          %s1125 = sand.u32 %s253, 1
          %s1126 = scalar_lea.sflag [#allocation4], %s1125
          %s1127 = sand.u32 %s253, 1
          %s1128 = smul.addr %s1127, 16
          %s1129 = scalar_lea.vmem [#allocation11], %s1128
          %1130 = dma.done %s1126, 256
        $region96: #{tpu_custom_call.1} parent=91 // pred_fallthru
          _
        // Predicated region
        $region97: #{tpu_custom_call.1} parent=91 // pred_check
          %p1131 = pneg %p296
        $region98: #{tpu_custom_call.1} parent=91 // pred_check_branch
          %1133 = sbr.rel (%p1131) target = $region100
        $region99: #{tpu_custom_call.1} parent=91 // pred_region
          %s1134 = sand.u32 %s35, 1
          %s1135 = scalar_lea.sflag [#allocation13], %s1134
          %s1136 = sand.u32 %s281, 1
          %s1137 = smul.addr %s1136, 16
          %s1138 = scalar_lea.vmem [#allocation12], %s1137
          %1139 = dma.done %s1135, 256
        $region100: #{tpu_custom_call.1} parent=91 // pred_fallthru
          _
        // Predicated region
        $region101: #{tpu_custom_call.1} parent=91 // pred_check
          %p1140 = pneg %p324
        $region102: #{tpu_custom_call.1} parent=91 // pred_check_branch
          %1142 = sbr.rel (%p1140) target = $region104
        $region103: #{tpu_custom_call.1} parent=91 // pred_region
          %s1143 = sand.u32 %s35, 1
          %s1144 = scalar_lea.sflag [#allocation13], %s1143
          %s1145 = sand.u32 %s309, 1
          %s1146 = smul.addr %s1145, 16
          %s1147 = scalar_lea.vmem [#allocation14], %s1146
          %1148 = dma.done %s1144, 256
        $region104: #{tpu_custom_call.1} parent=91 // pred_fallthru
          _
      $region92: #{tpu_custom_call.1} parent=5 // pred_fallthru
        _
    $region6: #{tpu_custom_call.1} parent=1 // loop_footer
      %s33 = sadd.s32 1, %s29
    $region7: #{tpu_custom_call.1} parent=1 // loop_footer_branch
      %28 = sbr.rel target = $region3
    $region8: #{tpu_custom_call.1} parent=1 // loop_exit
      _
    %1149 = vsyncpa [#allocation3], 1
    %s1150 = scalar_lea.sflag [#allocation3], 1
    %1151 = vsyncpa %s1150, 1
    %1152 = vsyncpa [#allocation6], 1
    %1153 = vsyncpa [#allocation9], 1
    %1154 = vsyncpa [#allocation4], 1
    %s1155 = scalar_lea.sflag [#allocation4], 1
    %1156 = vsyncpa %s1155, 1
    %1157 = vsyncpa [#allocation13], 1
    %s1158 = scalar_lea.sflag [#allocation13], 1
    %1159 = vsyncpa %s1158, 1

</llo_original>
